<compile_context>
chip_gen: v5e
topology: v5e:2x2
jax: 0.10.0
libtpu: 0.0.40
codegen_flags: <defaults>
</compile_context>

<pallas_src>
import functools
import math

import jax
import jax.numpy as jnp
from jax import lax
from jax.experimental import pallas as pl
from jax.experimental.pallas import tpu as pltpu

_LANE = 128
_SUBLANE = 8


def _round_up(x, m):
    return (x + m - 1) // m * m


def _gelu_exact(x):
    # PyTorch F.gelu default: exact erf GELU (kept in f32 for parity).
    return 0.5 * x * (1.0 + lax.erf(x * (1.0 / math.sqrt(2.0))))


def _gelu_tanh(x):
    # tanh-approx GELU; the tanh issues on the EUP slot and, in bf16, halves
    # VALU work on v6e/v7x.  Used on the bf16 compute path.
    c = math.sqrt(2.0 / math.pi)
    return 0.5 * x * (1.0 + jnp.tanh(c * (x + 0.044715 * (x * x * x))))


def _critic_kernel(x_ref, w1_ref, b1_ref, w2_ref, b2_ref, w3_ref, b3_ref,
                   o_ref, *, gelu):
    cdt = w1_ref.dtype
    x = x_ref[...].astype(cdt)                  # x stays f32 in HBM; cast here

    # shared_1: MXU matmul with f32 accumulation, bias add in f32.
    h1 = jnp.dot(x, w1_ref[...], preferred_element_type=jnp.float32)
    h1 = h1 + b1_ref[...]
    if gelu == "exact":
        h1 = _gelu_exact(h1).astype(cdt)        # f32 erf on VALU (parity path)
    else:
        h1 = _gelu_tanh(h1.astype(cdt))         # bf16 tanh -> EUP

    # shared_2
    h2 = jnp.dot(h1, w2_ref[...], preferred_element_type=jnp.float32)
    h2 = h2 + b2_ref[...]
    if gelu == "exact":
        h2 = _gelu_exact(h2)
    else:
        h2 = _gelu_tanh(h2.astype(cdt)).astype(jnp.float32)

    # out_value (hidden -> 1): VPU multiply + XLU lane reduction; avoids an
    # N=1 MXU pass.  w3/b3 stay f32 (no pointless bf16 round trip).
    v = jnp.sum(h2 * w3_ref[...], axis=-1, keepdims=True) + b3_ref[...]
    # TODO(synk): if profiling ever shows the (TB, 1) masked store exposed,
    # switch to a lane-dense (TB, 128) output block and slice column 0 outside.
    o_ref[...] = v.astype(o_ref.dtype)


def init_critic_params(key, input_dim, hidden_dim):
    """nn.Linear-style init (uniform +/- 1/sqrt(fan_in)).  Weights stored as
    (in, out) = PyTorch weight.T; biases as (out,)."""
    ks = jax.random.split(key, 6)

    def linear(kw, kb, fan_in, fan_out):
        bound = 1.0 / math.sqrt(fan_in)
        w = jax.random.uniform(kw, (fan_in, fan_out), jnp.float32, -bound, bound)
        b = jax.random.uniform(kb, (fan_out,), jnp.float32, -bound, bound)
        return w, b

    w1, b1 = linear(ks[0], ks[1], input_dim, hidden_dim)
    w2, b2 = linear(ks[2], ks[3], hidden_dim, hidden_dim)
    w3, b3 = linear(ks[4], ks[5], hidden_dim, 1)
    return {"w1": w1, "b1": b1, "w2": w2, "b2": b2, "w3": w3, "b3": b3}


def prepare_critic_params(params, compute_dtype=jnp.bfloat16, gelu=None):
    """Zero-pad feature dims to 128-lane multiples, cast the two MXU weights to
    the compute dtype.  Biases and the final (hid->1) weight stay f32.

    gelu: "exact" (erf, f32, PyTorch parity) or "tanh" (approx, compute dtype).
    Defaults to "exact" for f32 compute and "tanh" for bf16.

    Note: when hidden_dim is configurable, prefer multiples of 256 on v6e/v7x
    so each MXU pass runs full-width; padding here only rounds up to 128.
    """
    if gelu is None:
        gelu = "exact" if jnp.dtype(compute_dtype) == jnp.dtype(jnp.float32) else "tanh"

    w1, b1 = params["w1"], params["b1"]      # (in, hid), (hid,)
    w2, b2 = params["w2"], params["b2"]      # (hid, hid), (hid,)
    w3, b3 = params["w3"], params["b3"]      # (hid, 1),  (1,)
    in_dim, hid = w1.shape
    in_pad = _round_up(in_dim, _LANE)
    hid_pad = _round_up(hid, _LANE)

    w1p = jnp.zeros((in_pad, hid_pad), compute_dtype).at[:in_dim, :hid].set(
        w1.astype(compute_dtype))
    w2p = jnp.zeros((hid_pad, hid_pad), compute_dtype).at[:hid, :hid].set(
        w2.astype(compute_dtype))
    # Final weight kept f32 as a (1, hid_pad) row for the VPU mul + lane reduce.
    w3p = jnp.zeros((1, hid_pad), jnp.float32).at[0, :hid].set(
        w3[:, 0].astype(jnp.float32))
    b1p = jnp.zeros((1, hid_pad), jnp.float32).at[0, :hid].set(b1.astype(jnp.float32))
    b2p = jnp.zeros((1, hid_pad), jnp.float32).at[0, :hid].set(b2.astype(jnp.float32))
    b3p = jnp.reshape(b3.astype(jnp.float32), (1, 1))

    return {"w1": w1p, "b1": b1p, "w2": w2p, "b2": b2p, "w3": w3p, "b3": b3p,
            "in_dim": in_dim, "in_pad": in_pad, "hid_pad": hid_pad,
            "compute_dtype": compute_dtype, "gelu": gelu}


def _vmem_limit_bytes(TB, in_pad, hid_pad, cdt_bytes, single_buffer_weights):
    """Scoped-VMEM budget: resident weights (+double-buffering if we could not
    single-buffer them), double-buffered f32 x tile, output tile, and the f32
    intermediates, with ~50% headroom for compiler scratch."""
    wmul = 1 if single_buffer_weights else 2
    weights = wmul * (in_pad * hid_pad * cdt_bytes          # w1
                      + hid_pad * hid_pad * cdt_bytes       # w2
                      + 2 * hid_pad * 4                     # b1, b2 (f32)
                      + hid_pad * 4 + 4)                    # w3, b3 (f32)
    x_tiles = 2 * TB * in_pad * 4                           # x, double-buffered f32
    out_tiles = 2 * TB * 4
    inter = TB * hid_pad * (4 + 4 + cdt_bytes)              # h1/h2 f32 + compute-dtype copy
    total = weights + x_tiles + out_tiles + inter
    return int(min(max(total * 1.5, 8 << 20), 64 << 20))    # clamp to v7x physical VMEM


def critic_forward(x, prep, *, tile_batch=512, single_buffer_weights=True):
    """x: (B, input_dim) float32. prep: output of prepare_critic_params."""
    B, in_dim = x.shape
    assert in_dim == prep["in_dim"]
    in_pad, hid_pad = prep["in_pad"], prep["hid_pad"]
    cdt = prep["compute_dtype"]

    # Batch tile: multiple of 8 sublanes, capped at tile_batch (<= 512) rows,
    # and sized so the "parallel" grid axis has >= 2 steps whenever the batch
    # allows it (both v7x TensorCores get work).
    B8 = _round_up(max(B, 1), _SUBLANE)
    tb_cap = max(_SUBLANE, min(_round_up(tile_batch, _SUBLANE), 512))
    TB = min(tb_cap, max(_SUBLANE, _round_up(pl.cdiv(B8, 2), _SUBLANE)))
    B_pad = _round_up(B8, TB)
    n_tiles = B_pad // TB

    # Only pad/copy x when the shapes actually require it; x stays f32 and is
    # cast to the compute dtype inside the kernel (pre-pass cast avoided).
    if B_pad == B and in_pad == in_dim and x.dtype == jnp.float32:
        xp = x
    else:
        xp = jnp.zeros((B_pad, in_pad), jnp.float32).at[:B, :in_dim].set(
            x.astype(jnp.float32))

    w1, b1 = prep["w1"], prep["b1"]
    w2, b2 = prep["w2"], prep["b2"]
    w3, b3 = prep["w3"], prep["b3"]

    vmem_limit = _vmem_limit_bytes(TB, in_pad, hid_pad,
                                   jnp.dtype(cdt).itemsize,
                                   single_buffer_weights)
    kernel = functools.partial(_critic_kernel, gelu=prep["gelu"])

    def build(single_buf):
        def const(arr):
            # Constant index map -> VMEM-resident across the grid.  With
            # Buffered(1) Mosaic keeps one copy instead of double-buffering
            # (w2 is the dominant resident footprint).
            if single_buf:
                return pl.BlockSpec(arr.shape, lambda i: (0,) * arr.ndim,
                                    pipeline_mode=pl.Buffered(1))
            return pl.BlockSpec(arr.shape, lambda i: (0,) * arr.ndim)

        return pl.pallas_call(
            kernel,
            out_shape=jax.ShapeDtypeStruct((B_pad, 1), jnp.float32),
            grid_spec=pl.GridSpec(
                grid=(n_tiles,),
                in_specs=[pl.BlockSpec((TB, in_pad), lambda i: (i, 0)),
                          const(w1), const(b1), const(w2), const(b2),
                          const(w3), const(b3)],
                out_specs=pl.BlockSpec((TB, 1), lambda i: (i, 0)),
            ),
            compiler_params=pltpu.CompilerParams(
                dimension_semantics=("parallel",),
                vmem_limit_bytes=vmem_limit,
            ),
        )

    args = (xp, w1, b1, w2, b2, w3, b3)
    if single_buffer_weights:
        try:
            out = build(True)(*args)
        except Exception:
            # Fallback: let Mosaic pick buffering if Buffered(1) is rejected.
            out = build(False)(*args)
    else:
        out = build(False)(*args)

    return out[:B]


def critic_reference(x, params):
    h = x @ params["w1"] + params["b1"]
    h = _gelu_exact(h)
    h = h @ params["w2"] + params["b2"]
    h = _gelu_exact(h)
    return h @ params["w3"] + params["b3"]


if __name__ == "__main__":
    key = jax.random.PRNGKey(0)
    k_x, k_p = jax.random.split(key)

    batch, input_dim, hidden_dim = 8, 16, 32
    x = jax.random.normal(k_x, (batch, input_dim), jnp.float32)
    params = init_critic_params(k_p, input_dim, hidden_dim)
    ref = critic_reference(x, params)

    # f32 matmuls + exact erf GELU: parity with the PyTorch module.
    prep_f32 = prepare_critic_params(params, compute_dtype=jnp.float32)
    out_f32 = jax.block_until_ready(critic_forward(x, prep_f32))
    assert out_f32.shape == (batch, 1)
    assert jnp.allclose(out_f32, ref, atol=1e-5, rtol=1e-5)

    # bf16 matmul inputs (f32 accumulation) + bf16 tanh GELU: native-MXU-rate
    # path on v5e/v6e/v7x.  Dominant error source vs. the f32 reference is the
    # bf16 quantization of x / weights / GELU inputs, hence the loose tol.
    prep_bf16 = prepare_critic_params(params, compute_dtype=jnp.bfloat16)
    out_bf16 = jax.block_until_ready(critic_forward(x, prep_bf16))
    assert out_bf16.shape == (batch, 1)
    assert jnp.allclose(out_bf16, ref, atol=5e-2, rtol=5e-2)

    print("KERNEL_OK")
</pallas_src>

<mosaic_0001>
module attributes {stable_mosaic.version = 11 : i64} {
  func.func @_critic_kernel(%arg0: i32, %arg1: memref<8x128xf32, #tpu.memory_space<vmem>>, %arg2: memref<128x128xf32, #tpu.memory_space<vmem>>, %arg3: memref<1x128xf32, #tpu.memory_space<vmem>>, %arg4: memref<128x128xf32, #tpu.memory_space<vmem>>, %arg5: memref<1x128xf32, #tpu.memory_space<vmem>>, %arg6: memref<1x128xf32, #tpu.memory_space<vmem>>, %arg7: memref<1x1xf32, #tpu.memory_space<vmem>>, %arg8: memref<8x1xf32, #tpu.memory_space<vmem>>) attributes {dimension_semantics = [#tpu.dimension_semantics<parallel>], iteration_bounds = array<i64: 1>, scalar_prefetch = 0 : i64, scratch_operands = 0 : i64, tpu.core_type = #tpu.core_type<tc>, window_params = [{transform_indices = @transform_0, window_bounds = array<i64: 8, 128>}, {pipeline_mode = #tpu.pipeline_mode<synchronous>, transform_indices = @transform_1, window_bounds = array<i64: 128, 128>}, {pipeline_mode = #tpu.pipeline_mode<synchronous>, transform_indices = @transform_2, window_bounds = array<i64: 1, 128>}, {pipeline_mode = #tpu.pipeline_mode<synchronous>, transform_indices = @transform_3, window_bounds = array<i64: 128, 128>}, {pipeline_mode = #tpu.pipeline_mode<synchronous>, transform_indices = @transform_4, window_bounds = array<i64: 1, 128>}, {pipeline_mode = #tpu.pipeline_mode<synchronous>, transform_indices = @transform_5, window_bounds = array<i64: 1, 128>}, {pipeline_mode = #tpu.pipeline_mode<synchronous>, transform_indices = @transform_6, window_bounds = array<i64: 1, 1>}, {transform_indices = @transform_7, window_bounds = array<i64: 8, 1>}]} {
    %c0 = arith.constant 0 : index
    %c0_0 = arith.constant 0 : index
    %0 = vector.load %arg1[%c0, %c0_0] : memref<8x128xf32, #tpu.memory_space<vmem>>, vector<8x128xf32>
    %c0_1 = arith.constant 0 : index
    %c0_2 = arith.constant 0 : index
    %1 = vector.load %arg2[%c0_1, %c0_2] : memref<128x128xf32, #tpu.memory_space<vmem>>, vector<128x128xf32>
    %cst = arith.constant dense<0.000000e+00> : vector<8x128xf32>
    %2 = tpu.matmul %0, %1, %cst {dimension_numbers = #tpu.dot_dimension_numbers<[1], [0], [0], [1], [0, 0, 1, 1], [], []>} : vector<8x128xf32>, vector<128x128xf32>, vector<8x128xf32> -> vector<8x128xf32>
    %c0_3 = arith.constant 0 : index
    %c0_4 = arith.constant 0 : index
    %3 = vector.load %arg3[%c0_3, %c0_4] : memref<1x128xf32, #tpu.memory_space<vmem>>, vector<1x128xf32>
    %4 = vector.broadcast %3 : vector<1x128xf32> to vector<8x128xf32>
    %5 = arith.addf %2, %4 : vector<8x128xf32>
    %cst_5 = arith.constant 5.000000e-01 : f32
    %6 = vector.broadcast %cst_5 : f32 to vector<8x128xf32>
    %7 = arith.mulf %6, %5 : vector<8x128xf32>
    %cst_6 = arith.constant 0.707106769 : f32
    %8 = vector.broadcast %cst_6 : f32 to vector<8x128xf32>
    %9 = arith.mulf %5, %8 : vector<8x128xf32>
    %10 = math.erf %9 : vector<8x128xf32>
    %cst_7 = arith.constant 1.000000e+00 : f32
    %11 = vector.broadcast %cst_7 : f32 to vector<8x128xf32>
    %12 = arith.addf %11, %10 : vector<8x128xf32>
    %13 = arith.mulf %7, %12 : vector<8x128xf32>
    %c0_8 = arith.constant 0 : index
    %c0_9 = arith.constant 0 : index
    %14 = vector.load %arg4[%c0_8, %c0_9] : memref<128x128xf32, #tpu.memory_space<vmem>>, vector<128x128xf32>
    %cst_10 = arith.constant dense<0.000000e+00> : vector<8x128xf32>
    %15 = tpu.matmul %13, %14, %cst_10 {dimension_numbers = #tpu.dot_dimension_numbers<[1], [0], [0], [1], [0, 0, 1, 1], [], []>} : vector<8x128xf32>, vector<128x128xf32>, vector<8x128xf32> -> vector<8x128xf32>
    %c0_11 = arith.constant 0 : index
    %c0_12 = arith.constant 0 : index
    %16 = vector.load %arg5[%c0_11, %c0_12] : memref<1x128xf32, #tpu.memory_space<vmem>>, vector<1x128xf32>
    %17 = vector.broadcast %16 : vector<1x128xf32> to vector<8x128xf32>
    %18 = arith.addf %15, %17 : vector<8x128xf32>
    %cst_13 = arith.constant 5.000000e-01 : f32
    %19 = vector.broadcast %cst_13 : f32 to vector<8x128xf32>
    %20 = arith.mulf %19, %18 : vector<8x128xf32>
    %cst_14 = arith.constant 0.707106769 : f32
    %21 = vector.broadcast %cst_14 : f32 to vector<8x128xf32>
    %22 = arith.mulf %18, %21 : vector<8x128xf32>
    %23 = math.erf %22 : vector<8x128xf32>
    %cst_15 = arith.constant 1.000000e+00 : f32
    %24 = vector.broadcast %cst_15 : f32 to vector<8x128xf32>
    %25 = arith.addf %24, %23 : vector<8x128xf32>
    %26 = arith.mulf %20, %25 : vector<8x128xf32>
    %c0_16 = arith.constant 0 : index
    %c0_17 = arith.constant 0 : index
    %27 = vector.load %arg6[%c0_16, %c0_17] : memref<1x128xf32, #tpu.memory_space<vmem>>, vector<1x128xf32>
    %28 = vector.broadcast %27 : vector<1x128xf32> to vector<8x128xf32>
    %29 = arith.mulf %26, %28 : vector<8x128xf32>
    %cst_18 = arith.constant dense<0.000000e+00> : vector<8xf32>
    %30 = vector.multi_reduction <add>, %29, %cst_18 [1] : vector<8x128xf32> to vector<8xf32>
    %31 = vector.shape_cast %30 : vector<8xf32> to vector<8x1xf32>
    %c0_19 = arith.constant 0 : index
    %c0_20 = arith.constant 0 : index
    %32 = vector.load %arg7[%c0_19, %c0_20] : memref<1x1xf32, #tpu.memory_space<vmem>>, vector<1x1xf32>
    %33 = vector.broadcast %32 : vector<1x1xf32> to vector<8x1xf32>
    %34 = arith.addf %31, %33 : vector<8x1xf32>
    %c0_21 = arith.constant 0 : index
    %c0_22 = arith.constant 0 : index
    %35 = vector.load %arg8[%c0_21, %c0_22] : memref<8x1xf32, #tpu.memory_space<vmem>>, vector<8x1xf32>
    tpu.vector_store %arg8[%c0_21, %c0_22], %34 {strides = array<i32>} : memref<8x1xf32, #tpu.memory_space<vmem>>, vector<8x1xf32>,
    return
  }
  func.func @transform_0(%arg0: i32) -> (i32, i32) {
    %c0_i32 = arith.constant 0 : i32
    %c0_i32_0 = arith.constant 0 : i32
    return %arg0, %c0_i32 : i32, i32
  }
  func.func @transform_1(%arg0: i32) -> (i32, i32) {
    %c0_i32 = arith.constant 0 : i32
    %c0_i32_0 = arith.constant 0 : i32
    %c0_i32_1 = arith.constant 0 : i32
    return %c0_i32, %c0_i32_0 : i32, i32
  }
  func.func @transform_2(%arg0: i32) -> (i32, i32) {
    %c0_i32 = arith.constant 0 : i32
    %c0_i32_0 = arith.constant 0 : i32
    %c0_i32_1 = arith.constant 0 : i32
    return %c0_i32, %c0_i32_0 : i32, i32
  }
  func.func @transform_3(%arg0: i32) -> (i32, i32) {
    %c0_i32 = arith.constant 0 : i32
    %c0_i32_0 = arith.constant 0 : i32
    %c0_i32_1 = arith.constant 0 : i32
    return %c0_i32, %c0_i32_0 : i32, i32
  }
  func.func @transform_4(%arg0: i32) -> (i32, i32) {
    %c0_i32 = arith.constant 0 : i32
    %c0_i32_0 = arith.constant 0 : i32
    %c0_i32_1 = arith.constant 0 : i32
    return %c0_i32, %c0_i32_0 : i32, i32
  }
  func.func @transform_5(%arg0: i32) -> (i32, i32) {
    %c0_i32 = arith.constant 0 : i32
    %c0_i32_0 = arith.constant 0 : i32
    %c0_i32_1 = arith.constant 0 : i32
    return %c0_i32, %c0_i32_0 : i32, i32
  }
  func.func @transform_6(%arg0: i32) -> (i32, i32) {
    %c0_i32 = arith.constant 0 : i32
    %c0_i32_0 = arith.constant 0 : i32
    %c0_i32_1 = arith.constant 0 : i32
    return %c0_i32, %c0_i32_0 : i32, i32
  }
  func.func @transform_7(%arg0: i32) -> (i32, i32) {
    %c0_i32 = arith.constant 0 : i32
    %c0_i32_0 = arith.constant 0 : i32
    return %arg0, %c0_i32 : i32, i32
  }
}

module attributes {stable_mosaic.version = 11 : i64} {
  func.func @_critic_kernel(%arg0: i32, %arg1: memref<8x128xf32, #tpu.memory_space<vmem>>, %arg2: memref<128x128xf32, #tpu.memory_space<vmem>>, %arg3: memref<1x128xf32, #tpu.memory_space<vmem>>, %arg4: memref<128x128xf32, #tpu.memory_space<vmem>>, %arg5: memref<1x128xf32, #tpu.memory_space<vmem>>, %arg6: memref<1x128xf32, #tpu.memory_space<vmem>>, %arg7: memref<1x1xf32, #tpu.memory_space<vmem>>, %arg8: memref<8x1xf32, #tpu.memory_space<vmem>>) attributes {dimension_semantics = [#tpu.dimension_semantics<parallel>], iteration_bounds = array<i64: 1>, scalar_prefetch = 0 : i64, scratch_operands = 0 : i64, tpu.core_type = #tpu.core_type<tc>, window_params = [{transform_indices = @transform_0, window_bounds = array<i64: 8, 128>}, {pipeline_mode = #tpu.pipeline_mode<synchronous>, transform_indices = @transform_1, window_bounds = array<i64: 128, 128>}, {pipeline_mode = #tpu.pipeline_mode<synchronous>, transform_indices = @transform_2, window_bounds = array<i64: 1, 128>}, {pipeline_mode = #tpu.pipeline_mode<synchronous>, transform_indices = @transform_3, window_bounds = array<i64: 128, 128>}, {pipeline_mode = #tpu.pipeline_mode<synchronous>, transform_indices = @transform_4, window_bounds = array<i64: 1, 128>}, {pipeline_mode = #tpu.pipeline_mode<synchronous>, transform_indices = @transform_5, window_bounds = array<i64: 1, 128>}, {pipeline_mode = #tpu.pipeline_mode<synchronous>, transform_indices = @transform_6, window_bounds = array<i64: 1, 1>}, {transform_indices = @transform_7, window_bounds = array<i64: 8, 1>}]} {
    %c0 = arith.constant 0 : index
    %c0_0 = arith.constant 0 : index
    %0 = vector.load %arg1[%c0, %c0_0] : memref<8x128xf32, #tpu.memory_space<vmem>>, vector<8x128xf32>
    %c0_1 = arith.constant 0 : index
    %c0_2 = arith.constant 0 : index
    %1 = vector.load %arg2[%c0_1, %c0_2] : memref<128x128xf32, #tpu.memory_space<vmem>>, vector<128x128xf32>
    %cst = arith.constant dense<0.000000e+00> : vector<8x128xf32>
    %2 = tpu.matmul %0, %1, %cst {dimension_numbers = #tpu.dot_dimension_numbers<[1], [0], [0], [1], [0, 0, 1, 1], [], []>} : vector<8x128xf32>, vector<128x128xf32>, vector<8x128xf32> -> vector<8x128xf32>
    %c0_3 = arith.constant 0 : index
    %c0_4 = arith.constant 0 : index
    %3 = vector.load %arg3[%c0_3, %c0_4] : memref<1x128xf32, #tpu.memory_space<vmem>>, vector<1x128xf32>
    %4 = vector.broadcast %3 : vector<1x128xf32> to vector<8x128xf32>
    %5 = arith.addf %2, %4 : vector<8x128xf32>
    %cst_5 = arith.constant 5.000000e-01 : f32
    %6 = vector.broadcast %cst_5 : f32 to vector<8x128xf32>
    %7 = arith.mulf %6, %5 : vector<8x128xf32>
    %cst_6 = arith.constant 0.707106769 : f32
    %8 = vector.broadcast %cst_6 : f32 to vector<8x128xf32>
    %9 = arith.mulf %5, %8 : vector<8x128xf32>
    %10 = math.erf %9 : vector<8x128xf32>
    %cst_7 = arith.constant 1.000000e+00 : f32
    %11 = vector.broadcast %cst_7 : f32 to vector<8x128xf32>
    %12 = arith.addf %11, %10 : vector<8x128xf32>
    %13 = arith.mulf %7, %12 : vector<8x128xf32>
    %c0_8 = arith.constant 0 : index
    %c0_9 = arith.constant 0 : index
    %14 = vector.load %arg4[%c0_8, %c0_9] : memref<128x128xf32, #tpu.memory_space<vmem>>, vector<128x128xf32>
    %cst_10 = arith.constant dense<0.000000e+00> : vector<8x128xf32>
    %15 = tpu.matmul %13, %14, %cst_10 {dimension_numbers = #tpu.dot_dimension_numbers<[1], [0], [0], [1], [0, 0, 1, 1], [], []>} : vector<8x128xf32>, vector<128x128xf32>, vector<8x128xf32> -> vector<8x128xf32>
    %c0_11 = arith.constant 0 : index
    %c0_12 = arith.constant 0 : index
    %16 = vector.load %arg5[%c0_11, %c0_12] : memref<1x128xf32, #tpu.memory_space<vmem>>, vector<1x128xf32>
    %17 = vector.broadcast %16 : vector<1x128xf32> to vector<8x128xf32>
    %18 = arith.addf %15, %17 : vector<8x128xf32>
    %cst_13 = arith.constant 5.000000e-01 : f32
    %19 = vector.broadcast %cst_13 : f32 to vector<8x128xf32>
    %20 = arith.mulf %19, %18 : vector<8x128xf32>
    %cst_14 = arith.constant 0.707106769 : f32
    %21 = vector.broadcast %cst_14 : f32 to vector<8x128xf32>
    %22 = arith.mulf %18, %21 : vector<8x128xf32>
    %23 = math.erf %22 : vector<8x128xf32>
    %cst_15 = arith.constant 1.000000e+00 : f32
    %24 = vector.broadcast %cst_15 : f32 to vector<8x128xf32>
    %25 = arith.addf %24, %23 : vector<8x128xf32>
    %26 = arith.mulf %20, %25 : vector<8x128xf32>
    %c0_16 = arith.constant 0 : index
    %c0_17 = arith.constant 0 : index
    %27 = vector.load %arg6[%c0_16, %c0_17] : memref<1x128xf32, #tpu.memory_space<vmem>>, vector<1x128xf32>
    %28 = vector.broadcast %27 : vector<1x128xf32> to vector<8x128xf32>
    %29 = arith.mulf %26, %28 : vector<8x128xf32>
    %cst_18 = arith.constant dense<0.000000e+00> : vector<8xf32>
    %30 = vector.multi_reduction <add>, %29, %cst_18 [1] : vector<8x128xf32> to vector<8xf32>
    %31 = vector.shape_cast %30 : vector<8xf32> to vector<8x1xf32>
    %c0_19 = arith.constant 0 : index
    %c0_20 = arith.constant 0 : index
    %32 = vector.load %arg7[%c0_19, %c0_20] : memref<1x1xf32, #tpu.memory_space<vmem>>, vector<1x1xf32>
    %33 = vector.broadcast %32 : vector<1x1xf32> to vector<8x1xf32>
    %34 = arith.addf %31, %33 : vector<8x1xf32>
    %c0_21 = arith.constant 0 : index
    %c0_22 = arith.constant 0 : index
    %35 = vector.load %arg8[%c0_21, %c0_22] : memref<8x1xf32, #tpu.memory_space<vmem>>, vector<8x1xf32>
    tpu.vector_store %arg8[%c0_21, %c0_22], %34 {strides = array<i32>} : memref<8x1xf32, #tpu.memory_space<vmem>>, vector<8x1xf32>,
    return
  }
  func.func @transform_0(%arg0: i32) -> (i32, i32) {
    %c0_i32 = arith.constant 0 : i32
    %c0_i32_0 = arith.constant 0 : i32
    return %arg0, %c0_i32 : i32, i32
  }
  func.func @transform_1(%arg0: i32) -> (i32, i32) {
    %c0_i32 = arith.constant 0 : i32
    %c0_i32_0 = arith.constant 0 : i32
    %c0_i32_1 = arith.constant 0 : i32
    return %c0_i32, %c0_i32_0 : i32, i32
  }
  func.func @transform_2(%arg0: i32) -> (i32, i32) {
    %c0_i32 = arith.constant 0 : i32
    %c0_i32_0 = arith.constant 0 : i32
    %c0_i32_1 = arith.constant 0 : i32
    return %c0_i32, %c0_i32_0 : i32, i32
  }
  func.func @transform_3(%arg0: i32) -> (i32, i32) {
    %c0_i32 = arith.constant 0 : i32
    %c0_i32_0 = arith.constant 0 : i32
    %c0_i32_1 = arith.constant 0 : i32
    return %c0_i32, %c0_i32_0 : i32, i32
  }
  func.func @transform_4(%arg0: i32) -> (i32, i32) {
    %c0_i32 = arith.constant 0 : i32
    %c0_i32_0 = arith.constant 0 : i32
    %c0_i32_1 = arith.constant 0 : i32
    return %c0_i32, %c0_i32_0 : i32, i32
  }
  func.func @transform_5(%arg0: i32) -> (i32, i32) {
    %c0_i32 = arith.constant 0 : i32
    %c0_i32_0 = arith.constant 0 : i32
    %c0_i32_1 = arith.constant 0 : i32
    return %c0_i32, %c0_i32_0 : i32, i32
  }
  func.func @transform_6(%arg0: i32) -> (i32, i32) {
    %c0_i32 = arith.constant 0 : i32
    %c0_i32_0 = arith.constant 0 : i32
    %c0_i32_1 = arith.constant 0 : i32
    return %c0_i32, %c0_i32_0 : i32, i32
  }
  func.func @transform_7(%arg0: i32) -> (i32, i32) {
    %c0_i32 = arith.constant 0 : i32
    %c0_i32_0 = arith.constant 0 : i32
    return %arg0, %c0_i32 : i32, i32
  }
}

</mosaic_0001>

<llo_original>
// kernel: tpu_custom_call.1
$region0: #{tpu_custom_call.1}
  #allocation0 [shape = 'u32[]', space=smem, size = 0x4, offset = 0x4, fixed_abs, tag = 'smem constant byte address 0x4 - core index']
  #allocation1 [shape = 'u32[72,128]{1,0:T(1,128)}', space=vmem, size = 0x9000, scoped, tag = 'internal scratch']
  #allocation2 [shape = 'f32[1,1]{1,0:T(1,128)S(1)}', space=vmem, size = 0x200, scoped, tag = 'scoped memory for tpu_custom_call.1']
  %s0 = inlined_call_operand.hbm [shape: f32[8,128], index: 0, kind: input, shape index: {}]
  %s1 = inlined_call_operand.hbm [shape: f32[128,128], index: 1, kind: input, shape index: {}]
  %s2 = inlined_call_operand.vmem [shape: f32[1,128], index: 2, kind: input, shape index: {}]
  %s3 = inlined_call_operand.hbm [shape: f32[128,128], index: 3, kind: input, shape index: {}]
  %s4 = inlined_call_operand.vmem [shape: f32[1,128], index: 4, kind: input, shape index: {}]
  %s5 = inlined_call_operand.vmem [shape: f32[1,128], index: 5, kind: input, shape index: {}]
  %s6 = inlined_call_operand.<no memory space> [shape: f32[1,1], index: 6, kind: input, shape index: {}]
  %s7 = inlined_call_operand.vmem [shape: f32[8,1], index: 7, kind: output, shape index: {}]
  %s8 = sld [smem:[#allocation0]]
  $region50: #{tpu_custom_call.1} parent=0
    _
  %s10 = ssub.s32 1, %s8
  %s11 = scalar_select 0, %s10, %s8
  %v12 = vstv %s6
  %13 = vst [vmem:[#allocation2] sm:$0x1] %v12
  $region1: #{tpu_custom_call.1} parent=0
    #allocation3 [shape = 'u8[4096]{0}', space=vmem, size = 0x1000, scoped, tag = 'input window, operand 0, single buffered']
    #allocation4 [shape = 's32[1]{0}', space=sflag, size = 0x4, scoped, tag = 'scoped memory for tpu_custom_call.1']
    #allocation5 [shape = 'u8[65536]{0}', space=vmem, size = 0x10000, scoped, tag = 'input window, operand 1, single buffered']
    #allocation6 [shape = 's32[1]{0}', space=sflag, size = 0x4, scoped, tag = 'scoped memory for tpu_custom_call.1']
    #allocation7 [shape = 'u8[65536]{0}', space=vmem, size = 0x10000, scoped, tag = 'input window, operand 3, single buffered']
    %14 = vsyncpa [#allocation4], 0
    %15 = vsyncpa [#allocation6], 0
    // Predicated region
    $region2: #{tpu_custom_call.1} parent=1 // pred_check
      _
    $region3: #{tpu_custom_call.1} parent=1 // pred_check_branch
      %17 = sbr.rel (0) target = $region5
    $region4: #{tpu_custom_call.1} parent=1 // pred_region
      %19 = vsyncadd [#allocation4], 0
      %s21 = sshll.u32 %s0, 4
      %s22 = int_to_ptr.hbm [resolvable:$true] %s21
      %s23 = sshll.u32 [#allocation3], 4
      %s24 = int_to_ptr.vmem [resolvable:$true] %s23
      %26 = dma.hbm_to_vmem [thread:$0]  %s22, 128, %s24, [#allocation4]
    $region5: #{tpu_custom_call.1} parent=1 // pred_fallthru
      _
    // Predicated region
    $region6: #{tpu_custom_call.1} parent=1 // pred_check
      _
    $region7: #{tpu_custom_call.1} parent=1 // pred_check_branch
      %28 = sbr.rel (0) target = $region9
    $region8: #{tpu_custom_call.1} parent=1 // pred_region
      %30 = vsyncadd [#allocation6], 0
      %s31 = sshll.u32 %s1, 4
      %s32 = int_to_ptr.hbm [resolvable:$true] %s31
      %s33 = sshll.u32 [#allocation5], 4
      %s34 = int_to_ptr.vmem [resolvable:$true] %s33
      %39 = dma.hbm_to_vmem [thread:$0]  %s32, 2048, %s34, [#allocation6], 128, 128, 8
    $region9: #{tpu_custom_call.1} parent=1 // pred_fallthru
      _
    // Predicated region
    $region10: #{tpu_custom_call.1} parent=1 // pred_check
      _
    $region11: #{tpu_custom_call.1} parent=1 // pred_check_branch
      %41 = sbr.rel (0) target = $region13
    $region12: #{tpu_custom_call.1} parent=1 // pred_region
      _
    $region13: #{tpu_custom_call.1} parent=1 // pred_fallthru
      _
    // Predicated region
    $region14: #{tpu_custom_call.1} parent=1 // pred_check
      _
    $region15: #{tpu_custom_call.1} parent=1 // pred_check_branch
      %43 = sbr.rel (0) target = $region17
    $region16: #{tpu_custom_call.1} parent=1 // pred_region
      %45 = vsyncadd [#allocation6], 0
      %s46 = sshll.u32 %s3, 4
      %s47 = int_to_ptr.hbm [resolvable:$true] %s46
      %s48 = sshll.u32 [#allocation7], 4
      %s49 = int_to_ptr.vmem [resolvable:$true] %s48
      %54 = dma.hbm_to_vmem [thread:$0]  %s47, 2048, %s49, [#allocation6], 128, 128, 8
    $region17: #{tpu_custom_call.1} parent=1 // pred_fallthru
      _
    // Predicated region
    $region18: #{tpu_custom_call.1} parent=1 // pred_check
      _
    $region19: #{tpu_custom_call.1} parent=1 // pred_check_branch
      %56 = sbr.rel (0) target = $region21
    $region20: #{tpu_custom_call.1} parent=1 // pred_region
      _
    $region21: #{tpu_custom_call.1} parent=1 // pred_fallthru
      _
    // Predicated region
    $region22: #{tpu_custom_call.1} parent=1 // pred_check
      _
    $region23: #{tpu_custom_call.1} parent=1 // pred_check_branch
      %58 = sbr.rel (0) target = $region25
    $region24: #{tpu_custom_call.1} parent=1 // pred_region
      _
    $region25: #{tpu_custom_call.1} parent=1 // pred_fallthru
      _
    // Predicated region
    $region26: #{tpu_custom_call.1} parent=1 // pred_check
      _
    $region27: #{tpu_custom_call.1} parent=1 // pred_check_branch
      %60 = sbr.rel (0) target = $region29
    $region28: #{tpu_custom_call.1} parent=1 // pred_region
      _
    $region29: #{tpu_custom_call.1} parent=1 // pred_fallthru
      _
    // Predicated region
    $region30: #{tpu_custom_call.1} parent=1 // pred_check
      _
    $region31: #{tpu_custom_call.1} parent=1 // pred_check_branch
      %62 = sbr.rel (0) target = $region33
    $region32: #{tpu_custom_call.1} parent=1 // pred_region
      %64 = dma.done [#allocation4], 128
    $region33: #{tpu_custom_call.1} parent=1 // pred_fallthru
      _
    // Predicated region
    $region34: #{tpu_custom_call.1} parent=1 // pred_check
      _
    $region35: #{tpu_custom_call.1} parent=1 // pred_check_branch
      %66 = sbr.rel (0) target = $region37
    $region36: #{tpu_custom_call.1} parent=1 // pred_region
      %68 = dma.done [#allocation6], 2048
    $region37: #{tpu_custom_call.1} parent=1 // pred_fallthru
      _
    // Predicated region
    $region38: #{tpu_custom_call.1} parent=1 // pred_check
      _
    $region39: #{tpu_custom_call.1} parent=1 // pred_check_branch
      %70 = sbr.rel (0) target = $region41
    $region40: #{tpu_custom_call.1} parent=1 // pred_region
      %72 = dma.done [#allocation6], 2048
    $region41: #{tpu_custom_call.1} parent=1 // pred_fallthru
      _
    %v73 = vld [vmem:[#allocation3] sm:$0xff]
    %v74 = vld [vmem:[#allocation5] sm:$0xff]
    %v75 = vld [vmem:[#allocation5 + $0x8] sm:$0xff]
    %v76 = vld [vmem:[#allocation5 + $0x10] sm:$0xff]
    %v77 = vld [vmem:[#allocation5 + $0x18] sm:$0xff]
    %v78 = vld [vmem:[#allocation5 + $0x20] sm:$0xff]
    %v79 = vld [vmem:[#allocation5 + $0x28] sm:$0xff]
    %v80 = vld [vmem:[#allocation5 + $0x30] sm:$0xff]
    %v81 = vld [vmem:[#allocation5 + $0x38] sm:$0xff]
    %v82 = vld [vmem:[#allocation5 + $0x40] sm:$0xff]
    %v83 = vld [vmem:[#allocation5 + $0x48] sm:$0xff]
    %v84 = vld [vmem:[#allocation5 + $0x50] sm:$0xff]
    %v85 = vld [vmem:[#allocation5 + $0x58] sm:$0xff]
    %v86 = vld [vmem:[#allocation5 + $0x60] sm:$0xff]
    %v87 = vld [vmem:[#allocation5 + $0x68] sm:$0xff]
    %v88 = vld [vmem:[#allocation5 + $0x70] sm:$0xff]
    %v89 = vld [vmem:[#allocation5 + $0x78] sm:$0xff]
    %v90 = vld [vmem:[%s2] sm:$0x1]
    %v92 = vperm.slane %v90, 0
    %94 = vmatpush.msra.mxu0 %v89
    %95 = vmatpush.msra.mxu0 %v88
    %96 = vmatpush.msra.mxu0 %v87
    %97 = vmatpush.msra.mxu0 %v86
    %98 = vmatpush.msra.mxu0 %v85
    %99 = vmatpush.msra.mxu0 %v84
    %100 = vmatpush.msra.mxu0 %v83
    %101 = vmatpush.msra.mxu0 %v82
    %102 = vmatpush.msra.mxu0 %v81
    %103 = vmatpush.msra.mxu0 %v80
    %104 = vmatpush.msra.mxu0 %v79
    %105 = vmatpush.msra.mxu0 %v78
    %106 = vmatpush.msra.mxu0 %v77
    %107 = vmatpush.msra.mxu0 %v76
    %108 = vmatpush.msra.mxu0 %v75
    %109 = vmatpush.msra.mxu0 %v74
    %110 = vmatmul.f32.gmra.mxu0 %v73
    %v111 = vpop.f32.mrf.mxu0
    %v112 = vadd.f32 %v92, %v111
    %113 = vdwg.mxu0
    %v114 = vmul.f32 %v112, 0.5
    %v115 = vmul.f32 %v112, 0.70710677
    %v116 = vmul.f32 %v115, %v115
    %v117 = vmin.f32 16.0, %v116
    %v118 = vmul.f32 %v117, 2.1237322e-06
    %v119 = vadd.f32 %v118, 0.00028619796
    %v120 = vmul.f32 %v117, %v119
    %v121 = vadd.f32 %v120, 0.0036580483
    %v122 = vmul.f32 %v117, %v121
    %v123 = vadd.f32 %v122, 0.05243302
    %v124 = vmul.f32 %v117, %v123
    %v125 = vadd.f32 %v124, 0.18741608
    %v126 = vmul.f32 %v117, %v125
    %v127 = vadd.f32 %v126, 1.1283791
    %v128 = vmul.f32 %v115, %v127
    %v129 = vmul.f32 %v117, 3.8918573e-05
    %v130 = vadd.f32 %v129, 0.001143296
    %v131 = vmul.f32 %v117, %v130
    %v132 = vadd.f32 %v131, 0.014752088
    %v133 = vmul.f32 %v117, %v132
    %v134 = vadd.f32 %v133, 0.112945676
    %v135 = vmul.f32 %v117, %v134
    %v136 = vadd.f32 %v135, 0.4994258
    %v137 = vmul.f32 %v117, %v136
    %v138 = vadd.f32 %v137, 1.0
    %v139 = vrcp.pop %v138
    %v140 = vmul.f32 %v138, %v139
    %v141 = vsub.f32 1.0, %v140
    %v142 = vmul.f32 %v139, %v141
    %v143 = vadd.f32 %v139, %v142
    %vm144 = vweird.f32 %v138
    %vm145 = vweird.f32 %v139
    %vm146 = vmor %vm144, %vm145
    %v147 = vsel %vm146, %v139, %v143
    %v148 = vand.u32 2147483647, %v138
    %vm149 = vcmp.eq.f32.partialorder %v148, 8.507059e+37
    %v150 = vand.u32 %v138, 2147483648
    %v151 = vor.u32 1.1754944e-38, %v150
    %v152 = vsel %vm149, %v151, %v147
    %v153 = vmul.f32 %v128, %v152
    %v154 = vmin.f32 %v153, 1.0
    %v155 = vmax.f32 %v154, -1.0
    %v156 = vadd.f32 %v155, 1.0
    %v157 = vmul.f32 %v114, %v156
    %v158 = vld [vmem:[#allocation7] sm:$0xff]
    %v159 = vld [vmem:[#allocation7 + $0x8] sm:$0xff]
    %v160 = vld [vmem:[#allocation7 + $0x10] sm:$0xff]
    %v161 = vld [vmem:[#allocation7 + $0x18] sm:$0xff]
    %v162 = vld [vmem:[#allocation7 + $0x20] sm:$0xff]
    %v163 = vld [vmem:[#allocation7 + $0x28] sm:$0xff]
    %v164 = vld [vmem:[#allocation7 + $0x30] sm:$0xff]
    %v165 = vld [vmem:[#allocation7 + $0x38] sm:$0xff]
    %v166 = vld [vmem:[#allocation7 + $0x40] sm:$0xff]
    %v167 = vld [vmem:[#allocation7 + $0x48] sm:$0xff]
    %v168 = vld [vmem:[#allocation7 + $0x50] sm:$0xff]
    %v169 = vld [vmem:[#allocation7 + $0x58] sm:$0xff]
    %v170 = vld [vmem:[#allocation7 + $0x60] sm:$0xff]
    %v171 = vld [vmem:[#allocation7 + $0x68] sm:$0xff]
    %v172 = vld [vmem:[#allocation7 + $0x70] sm:$0xff]
    %v173 = vld [vmem:[#allocation7 + $0x78] sm:$0xff]
    %v174 = vld [vmem:[%s4] sm:$0x1]
    %v176 = vperm.slane %v174, 0
    %178 = vmatpush.msra.mxu0 %v173
    %179 = vmatpush.msra.mxu0 %v172
    %180 = vmatpush.msra.mxu0 %v171
    %181 = vmatpush.msra.mxu0 %v170
    %182 = vmatpush.msra.mxu0 %v169
    %183 = vmatpush.msra.mxu0 %v168
    %184 = vmatpush.msra.mxu0 %v167
    %185 = vmatpush.msra.mxu0 %v166
    %186 = vmatpush.msra.mxu0 %v165
    %187 = vmatpush.msra.mxu0 %v164
    %188 = vmatpush.msra.mxu0 %v163
    %189 = vmatpush.msra.mxu0 %v162
    %190 = vmatpush.msra.mxu0 %v161
    %191 = vmatpush.msra.mxu0 %v160
    %192 = vmatpush.msra.mxu0 %v159
    %193 = vmatpush.msra.mxu0 %v158
    %194 = vmatmul.f32.gmra.mxu0 %v157
    %v195 = vpop.f32.mrf.mxu0
    %v196 = vadd.f32 %v176, %v195
    %197 = vdwg.mxu0
    %v198 = vmul.f32 %v196, 0.5
    %v199 = vmul.f32 %v196, 0.70710677
    %v200 = vmul.f32 %v199, %v199
    %v201 = vmin.f32 16.0, %v200
    %v202 = vmul.f32 %v201, 2.1237322e-06
    %v203 = vadd.f32 %v202, 0.00028619796
    %v204 = vmul.f32 %v201, %v203
    %v205 = vadd.f32 %v204, 0.0036580483
    %v206 = vmul.f32 %v201, %v205
    %v207 = vadd.f32 %v206, 0.05243302
    %v208 = vmul.f32 %v201, %v207
    %v209 = vadd.f32 %v208, 0.18741608
    %v210 = vmul.f32 %v201, %v209
    %v211 = vadd.f32 %v210, 1.1283791
    %v212 = vmul.f32 %v199, %v211
    %v213 = vmul.f32 %v201, 3.8918573e-05
    %v214 = vadd.f32 %v213, 0.001143296
    %v215 = vmul.f32 %v201, %v214
    %v216 = vadd.f32 %v215, 0.014752088
    %v217 = vmul.f32 %v201, %v216
    %v218 = vadd.f32 %v217, 0.112945676
    %v219 = vmul.f32 %v201, %v218
    %v220 = vadd.f32 %v219, 0.4994258
    %v221 = vmul.f32 %v201, %v220
    %v222 = vadd.f32 %v221, 1.0
    %v223 = vrcp.pop %v222
    %v224 = vmul.f32 %v222, %v223
    %v225 = vsub.f32 1.0, %v224
    %v226 = vmul.f32 %v223, %v225
    %v227 = vadd.f32 %v223, %v226
    %vm228 = vweird.f32 %v222
    %vm229 = vweird.f32 %v223
    %vm230 = vmor %vm228, %vm229
    %v231 = vsel %vm230, %v223, %v227
    %v232 = vand.u32 2147483647, %v222
    %vm233 = vcmp.eq.f32.partialorder %v232, 8.507059e+37
    %v234 = vand.u32 %v222, 2147483648
    %v235 = vor.u32 1.1754944e-38, %v234
    %v236 = vsel %vm233, %v235, %v231
    %v237 = vmul.f32 %v212, %v236
    %v238 = vmin.f32 %v237, 1.0
    %v239 = vmax.f32 %v238, -1.0
    %v240 = vadd.f32 %v239, 1.0
    %v241 = vmul.f32 %v198, %v240
    %v242 = vld [vmem:[%s5] sm:$0x1]
    %v244 = vperm.slane %v242, 0
    %v246 = vmul.f32 %v241, %v244
    %247 = vadd.xlane.f32.xlu0 %v246
    %v248 = vpop.xlane.xlu0 %247
    %v249 = vld [vmem:[#allocation2] sm:$0x1]
    %v251 = vperm.slane %v249, 0
    %v253 = vadd.f32 %v248, %v251
    %vm254 = vcmask 7168
    %255 = vst.msk [vmem:[%s7] sm:$0xff] %vm254, %v253
    // Predicated region
    $region42: #{tpu_custom_call.1} parent=1 // pred_check
      _
    $region43: #{tpu_custom_call.1} parent=1 // pred_check_branch
      %257 = sbr.rel (0) target = $region45
    $region44: #{tpu_custom_call.1} parent=1 // pred_region
      _
    $region45: #{tpu_custom_call.1} parent=1 // pred_fallthru
      _
    // Predicated region
    $region46: #{tpu_custom_call.1} parent=1 // pred_check
      _
    $region47: #{tpu_custom_call.1} parent=1 // pred_check_branch
      %259 = sbr.rel (0) target = $region49
    $region48: #{tpu_custom_call.1} parent=1 // pred_region
      _
    $region49: #{tpu_custom_call.1} parent=1 // pred_fallthru
      _
    %260 = vsyncpa [#allocation4], 1
    %261 = vsyncpa [#allocation6], 1

// kernel: tpu_custom_call.1
$region0: #{tpu_custom_call.1}
  #allocation0 [shape = 'u32[]', space=smem, size = 0x4, offset = 0x4, fixed_abs, tag = 'smem constant byte address 0x4 - core index']
  #allocation1 [shape = 'u32[72,128]{1,0:T(1,128)}', space=vmem, size = 0x9000, scoped, tag = 'internal scratch']
  #allocation2 [shape = 'f32[1,1]{1,0:T(1,128)S(1)}', space=vmem, size = 0x200, scoped, tag = 'scoped memory for tpu_custom_call.1']
  %s0 = inlined_call_operand.hbm [shape: f32[8,128], index: 0, kind: input, shape index: {}]
  %s1 = inlined_call_operand.hbm [shape: f32[128,128], index: 1, kind: input, shape index: {}]
  %s2 = inlined_call_operand.vmem [shape: f32[1,128], index: 2, kind: input, shape index: {}]
  %s3 = inlined_call_operand.hbm [shape: f32[128,128], index: 3, kind: input, shape index: {}]
  %s4 = inlined_call_operand.vmem [shape: f32[1,128], index: 4, kind: input, shape index: {}]
  %s5 = inlined_call_operand.vmem [shape: f32[1,128], index: 5, kind: input, shape index: {}]
  %s6 = inlined_call_operand.<no memory space> [shape: f32[1,1], index: 6, kind: input, shape index: {}]
  %s7 = inlined_call_operand.vmem [shape: f32[8,1], index: 7, kind: output, shape index: {}]
  %s8 = sld [smem:[#allocation0]]
  $region50: #{tpu_custom_call.1} parent=0
    _
  %s10 = ssub.s32 1, %s8
  %s11 = scalar_select 0, %s10, %s8
  %v12 = vstv %s6
  %13 = vst [vmem:[#allocation2] sm:$0x1] %v12
  $region1: #{tpu_custom_call.1} parent=0
    #allocation3 [shape = 'u8[4096]{0}', space=vmem, size = 0x1000, scoped, tag = 'input window, operand 0, single buffered']
    #allocation4 [shape = 's32[1]{0}', space=sflag, size = 0x4, scoped, tag = 'scoped memory for tpu_custom_call.1']
    #allocation5 [shape = 'u8[65536]{0}', space=vmem, size = 0x10000, scoped, tag = 'input window, operand 1, single buffered']
    #allocation6 [shape = 's32[1]{0}', space=sflag, size = 0x4, scoped, tag = 'scoped memory for tpu_custom_call.1']
    #allocation7 [shape = 'u8[65536]{0}', space=vmem, size = 0x10000, scoped, tag = 'input window, operand 3, single buffered']
    %14 = vsyncpa [#allocation4], 0
    %15 = vsyncpa [#allocation6], 0
    // Predicated region
    $region2: #{tpu_custom_call.1} parent=1 // pred_check
      _
    $region3: #{tpu_custom_call.1} parent=1 // pred_check_branch
      %17 = sbr.rel (0) target = $region5
    $region4: #{tpu_custom_call.1} parent=1 // pred_region
      %19 = vsyncadd [#allocation4], 0
      %s21 = sshll.u32 %s0, 4
      %s22 = int_to_ptr.hbm [resolvable:$true] %s21
      %s23 = sshll.u32 [#allocation3], 4
      %s24 = int_to_ptr.vmem [resolvable:$true] %s23
      %26 = dma.hbm_to_vmem [thread:$0]  %s22, 128, %s24, [#allocation4]
    $region5: #{tpu_custom_call.1} parent=1 // pred_fallthru
      _
    // Predicated region
    $region6: #{tpu_custom_call.1} parent=1 // pred_check
      _
    $region7: #{tpu_custom_call.1} parent=1 // pred_check_branch
      %28 = sbr.rel (0) target = $region9
    $region8: #{tpu_custom_call.1} parent=1 // pred_region
      %30 = vsyncadd [#allocation6], 0
      %s31 = sshll.u32 %s1, 4
      %s32 = int_to_ptr.hbm [resolvable:$true] %s31
      %s33 = sshll.u32 [#allocation5], 4
      %s34 = int_to_ptr.vmem [resolvable:$true] %s33
      %39 = dma.hbm_to_vmem [thread:$0]  %s32, 2048, %s34, [#allocation6], 128, 128, 8
    $region9: #{tpu_custom_call.1} parent=1 // pred_fallthru
      _
    // Predicated region
    $region10: #{tpu_custom_call.1} parent=1 // pred_check
      _
    $region11: #{tpu_custom_call.1} parent=1 // pred_check_branch
      %41 = sbr.rel (0) target = $region13
    $region12: #{tpu_custom_call.1} parent=1 // pred_region
      _
    $region13: #{tpu_custom_call.1} parent=1 // pred_fallthru
      _
    // Predicated region
    $region14: #{tpu_custom_call.1} parent=1 // pred_check
      _
    $region15: #{tpu_custom_call.1} parent=1 // pred_check_branch
      %43 = sbr.rel (0) target = $region17
    $region16: #{tpu_custom_call.1} parent=1 // pred_region
      %45 = vsyncadd [#allocation6], 0
      %s46 = sshll.u32 %s3, 4
      %s47 = int_to_ptr.hbm [resolvable:$true] %s46
      %s48 = sshll.u32 [#allocation7], 4
      %s49 = int_to_ptr.vmem [resolvable:$true] %s48
      %54 = dma.hbm_to_vmem [thread:$0]  %s47, 2048, %s49, [#allocation6], 128, 128, 8
    $region17: #{tpu_custom_call.1} parent=1 // pred_fallthru
      _
    // Predicated region
    $region18: #{tpu_custom_call.1} parent=1 // pred_check
      _
    $region19: #{tpu_custom_call.1} parent=1 // pred_check_branch
      %56 = sbr.rel (0) target = $region21
    $region20: #{tpu_custom_call.1} parent=1 // pred_region
      _
    $region21: #{tpu_custom_call.1} parent=1 // pred_fallthru
      _
    // Predicated region
    $region22: #{tpu_custom_call.1} parent=1 // pred_check
      _
    $region23: #{tpu_custom_call.1} parent=1 // pred_check_branch
      %58 = sbr.rel (0) target = $region25
    $region24: #{tpu_custom_call.1} parent=1 // pred_region
      _
    $region25: #{tpu_custom_call.1} parent=1 // pred_fallthru
      _
    // Predicated region
    $region26: #{tpu_custom_call.1} parent=1 // pred_check
      _
    $region27: #{tpu_custom_call.1} parent=1 // pred_check_branch
      %60 = sbr.rel (0) target = $region29
    $region28: #{tpu_custom_call.1} parent=1 // pred_region
      _
    $region29: #{tpu_custom_call.1} parent=1 // pred_fallthru
      _
    // Predicated region
    $region30: #{tpu_custom_call.1} parent=1 // pred_check
      _
    $region31: #{tpu_custom_call.1} parent=1 // pred_check_branch
      %62 = sbr.rel (0) target = $region33
    $region32: #{tpu_custom_call.1} parent=1 // pred_region
      %64 = dma.done [#allocation4], 128
    $region33: #{tpu_custom_call.1} parent=1 // pred_fallthru
      _
    // Predicated region
    $region34: #{tpu_custom_call.1} parent=1 // pred_check
      _
    $region35: #{tpu_custom_call.1} parent=1 // pred_check_branch
      %66 = sbr.rel (0) target = $region37
    $region36: #{tpu_custom_call.1} parent=1 // pred_region
      %68 = dma.done [#allocation6], 2048
    $region37: #{tpu_custom_call.1} parent=1 // pred_fallthru
      _
    // Predicated region
    $region38: #{tpu_custom_call.1} parent=1 // pred_check
      _
    $region39: #{tpu_custom_call.1} parent=1 // pred_check_branch
      %70 = sbr.rel (0) target = $region41
    $region40: #{tpu_custom_call.1} parent=1 // pred_region
      %72 = dma.done [#allocation6], 2048
    $region41: #{tpu_custom_call.1} parent=1 // pred_fallthru
      _
    %v73 = vld [vmem:[#allocation3] sm:$0xff]
    %v74 = vld [vmem:[#allocation5] sm:$0xff]
    %v75 = vld [vmem:[#allocation5 + $0x8] sm:$0xff]
    %v76 = vld [vmem:[#allocation5 + $0x10] sm:$0xff]
    %v77 = vld [vmem:[#allocation5 + $0x18] sm:$0xff]
    %v78 = vld [vmem:[#allocation5 + $0x20] sm:$0xff]
    %v79 = vld [vmem:[#allocation5 + $0x28] sm:$0xff]
    %v80 = vld [vmem:[#allocation5 + $0x30] sm:$0xff]
    %v81 = vld [vmem:[#allocation5 + $0x38] sm:$0xff]
    %v82 = vld [vmem:[#allocation5 + $0x40] sm:$0xff]
    %v83 = vld [vmem:[#allocation5 + $0x48] sm:$0xff]
    %v84 = vld [vmem:[#allocation5 + $0x50] sm:$0xff]
    %v85 = vld [vmem:[#allocation5 + $0x58] sm:$0xff]
    %v86 = vld [vmem:[#allocation5 + $0x60] sm:$0xff]
    %v87 = vld [vmem:[#allocation5 + $0x68] sm:$0xff]
    %v88 = vld [vmem:[#allocation5 + $0x70] sm:$0xff]
    %v89 = vld [vmem:[#allocation5 + $0x78] sm:$0xff]
    %v90 = vld [vmem:[%s2] sm:$0x1]
    %v92 = vperm.slane %v90, 0
    %94 = vmatpush.msra.mxu0 %v89
    %95 = vmatpush.msra.mxu0 %v88
    %96 = vmatpush.msra.mxu0 %v87
    %97 = vmatpush.msra.mxu0 %v86
    %98 = vmatpush.msra.mxu0 %v85
    %99 = vmatpush.msra.mxu0 %v84
    %100 = vmatpush.msra.mxu0 %v83
    %101 = vmatpush.msra.mxu0 %v82
    %102 = vmatpush.msra.mxu0 %v81
    %103 = vmatpush.msra.mxu0 %v80
    %104 = vmatpush.msra.mxu0 %v79
    %105 = vmatpush.msra.mxu0 %v78
    %106 = vmatpush.msra.mxu0 %v77
    %107 = vmatpush.msra.mxu0 %v76
    %108 = vmatpush.msra.mxu0 %v75
    %109 = vmatpush.msra.mxu0 %v74
    %110 = vmatmul.f32.gmra.mxu0 %v73
    %v111 = vpop.f32.mrf.mxu0
    %v112 = vadd.f32 %v92, %v111
    %113 = vdwg.mxu0
    %v114 = vmul.f32 %v112, 0.5
    %v115 = vmul.f32 %v112, 0.70710677
    %v116 = vmul.f32 %v115, %v115
    %v117 = vmin.f32 16.0, %v116
    %v118 = vmul.f32 %v117, 2.1237322e-06
    %v119 = vadd.f32 %v118, 0.00028619796
    %v120 = vmul.f32 %v117, %v119
    %v121 = vadd.f32 %v120, 0.0036580483
    %v122 = vmul.f32 %v117, %v121
    %v123 = vadd.f32 %v122, 0.05243302
    %v124 = vmul.f32 %v117, %v123
    %v125 = vadd.f32 %v124, 0.18741608
    %v126 = vmul.f32 %v117, %v125
    %v127 = vadd.f32 %v126, 1.1283791
    %v128 = vmul.f32 %v115, %v127
    %v129 = vmul.f32 %v117, 3.8918573e-05
    %v130 = vadd.f32 %v129, 0.001143296
    %v131 = vmul.f32 %v117, %v130
    %v132 = vadd.f32 %v131, 0.014752088
    %v133 = vmul.f32 %v117, %v132
    %v134 = vadd.f32 %v133, 0.112945676
    %v135 = vmul.f32 %v117, %v134
    %v136 = vadd.f32 %v135, 0.4994258
    %v137 = vmul.f32 %v117, %v136
    %v138 = vadd.f32 %v137, 1.0
    %v139 = vrcp.pop %v138
    %v140 = vmul.f32 %v138, %v139
    %v141 = vsub.f32 1.0, %v140
    %v142 = vmul.f32 %v139, %v141
    %v143 = vadd.f32 %v139, %v142
    %vm144 = vweird.f32 %v138
    %vm145 = vweird.f32 %v139
    %vm146 = vmor %vm144, %vm145
    %v147 = vsel %vm146, %v139, %v143
    %v148 = vand.u32 2147483647, %v138
    %vm149 = vcmp.eq.f32.partialorder %v148, 8.507059e+37
    %v150 = vand.u32 %v138, 2147483648
    %v151 = vor.u32 1.1754944e-38, %v150
    %v152 = vsel %vm149, %v151, %v147
    %v153 = vmul.f32 %v128, %v152
    %v154 = vmin.f32 %v153, 1.0
    %v155 = vmax.f32 %v154, -1.0
    %v156 = vadd.f32 %v155, 1.0
    %v157 = vmul.f32 %v114, %v156
    %v158 = vld [vmem:[#allocation7] sm:$0xff]
    %v159 = vld [vmem:[#allocation7 + $0x8] sm:$0xff]
    %v160 = vld [vmem:[#allocation7 + $0x10] sm:$0xff]
    %v161 = vld [vmem:[#allocation7 + $0x18] sm:$0xff]
    %v162 = vld [vmem:[#allocation7 + $0x20] sm:$0xff]
    %v163 = vld [vmem:[#allocation7 + $0x28] sm:$0xff]
    %v164 = vld [vmem:[#allocation7 + $0x30] sm:$0xff]
    %v165 = vld [vmem:[#allocation7 + $0x38] sm:$0xff]
    %v166 = vld [vmem:[#allocation7 + $0x40] sm:$0xff]
    %v167 = vld [vmem:[#allocation7 + $0x48] sm:$0xff]
    %v168 = vld [vmem:[#allocation7 + $0x50] sm:$0xff]
    %v169 = vld [vmem:[#allocation7 + $0x58] sm:$0xff]
    %v170 = vld [vmem:[#allocation7 + $0x60] sm:$0xff]
    %v171 = vld [vmem:[#allocation7 + $0x68] sm:$0xff]
    %v172 = vld [vmem:[#allocation7 + $0x70] sm:$0xff]
    %v173 = vld [vmem:[#allocation7 + $0x78] sm:$0xff]
    %v174 = vld [vmem:[%s4] sm:$0x1]
    %v176 = vperm.slane %v174, 0
    %178 = vmatpush.msra.mxu0 %v173
    %179 = vmatpush.msra.mxu0 %v172
    %180 = vmatpush.msra.mxu0 %v171
    %181 = vmatpush.msra.mxu0 %v170
    %182 = vmatpush.msra.mxu0 %v169
    %183 = vmatpush.msra.mxu0 %v168
    %184 = vmatpush.msra.mxu0 %v167
    %185 = vmatpush.msra.mxu0 %v166
    %186 = vmatpush.msra.mxu0 %v165
    %187 = vmatpush.msra.mxu0 %v164
    %188 = vmatpush.msra.mxu0 %v163
    %189 = vmatpush.msra.mxu0 %v162
    %190 = vmatpush.msra.mxu0 %v161
    %191 = vmatpush.msra.mxu0 %v160
    %192 = vmatpush.msra.mxu0 %v159
    %193 = vmatpush.msra.mxu0 %v158
    %194 = vmatmul.f32.gmra.mxu0 %v157
    %v195 = vpop.f32.mrf.mxu0
    %v196 = vadd.f32 %v176, %v195
    %197 = vdwg.mxu0
    %v198 = vmul.f32 %v196, 0.5
    %v199 = vmul.f32 %v196, 0.70710677
    %v200 = vmul.f32 %v199, %v199
    %v201 = vmin.f32 16.0, %v200
    %v202 = vmul.f32 %v201, 2.1237322e-06
    %v203 = vadd.f32 %v202, 0.00028619796
    %v204 = vmul.f32 %v201, %v203
    %v205 = vadd.f32 %v204, 0.0036580483
    %v206 = vmul.f32 %v201, %v205
    %v207 = vadd.f32 %v206, 0.05243302
    %v208 = vmul.f32 %v201, %v207
    %v209 = vadd.f32 %v208, 0.18741608
    %v210 = vmul.f32 %v201, %v209
    %v211 = vadd.f32 %v210, 1.1283791
    %v212 = vmul.f32 %v199, %v211
    %v213 = vmul.f32 %v201, 3.8918573e-05
    %v214 = vadd.f32 %v213, 0.001143296
    %v215 = vmul.f32 %v201, %v214
    %v216 = vadd.f32 %v215, 0.014752088
    %v217 = vmul.f32 %v201, %v216
    %v218 = vadd.f32 %v217, 0.112945676
    %v219 = vmul.f32 %v201, %v218
    %v220 = vadd.f32 %v219, 0.4994258
    %v221 = vmul.f32 %v201, %v220
    %v222 = vadd.f32 %v221, 1.0
    %v223 = vrcp.pop %v222
    %v224 = vmul.f32 %v222, %v223
    %v225 = vsub.f32 1.0, %v224
    %v226 = vmul.f32 %v223, %v225
    %v227 = vadd.f32 %v223, %v226
    %vm228 = vweird.f32 %v222
    %vm229 = vweird.f32 %v223
    %vm230 = vmor %vm228, %vm229
    %v231 = vsel %vm230, %v223, %v227
    %v232 = vand.u32 2147483647, %v222
    %vm233 = vcmp.eq.f32.partialorder %v232, 8.507059e+37
    %v234 = vand.u32 %v222, 2147483648
    %v235 = vor.u32 1.1754944e-38, %v234
    %v236 = vsel %vm233, %v235, %v231
    %v237 = vmul.f32 %v212, %v236
    %v238 = vmin.f32 %v237, 1.0
    %v239 = vmax.f32 %v238, -1.0
    %v240 = vadd.f32 %v239, 1.0
    %v241 = vmul.f32 %v198, %v240
    %v242 = vld [vmem:[%s5] sm:$0x1]
    %v244 = vperm.slane %v242, 0
    %v246 = vmul.f32 %v241, %v244
    %247 = vadd.xlane.f32.xlu0 %v246
    %v248 = vpop.xlane.xlu0 %247
    %v249 = vld [vmem:[#allocation2] sm:$0x1]
    %v251 = vperm.slane %v249, 0
    %v253 = vadd.f32 %v248, %v251
    %vm254 = vcmask 7168
    %255 = vst.msk [vmem:[%s7] sm:$0xff] %vm254, %v253
    // Predicated region
    $region42: #{tpu_custom_call.1} parent=1 // pred_check
      _
    $region43: #{tpu_custom_call.1} parent=1 // pred_check_branch
      %257 = sbr.rel (0) target = $region45
    $region44: #{tpu_custom_call.1} parent=1 // pred_region
      _
    $region45: #{tpu_custom_call.1} parent=1 // pred_fallthru
      _
    // Predicated region
    $region46: #{tpu_custom_call.1} parent=1 // pred_check
      _
    $region47: #{tpu_custom_call.1} parent=1 // pred_check_branch
      %259 = sbr.rel (0) target = $region49
    $region48: #{tpu_custom_call.1} parent=1 // pred_region
      _
    $region49: #{tpu_custom_call.1} parent=1 // pred_fallthru
      _
    %260 = vsyncpa [#allocation4], 1
    %261 = vsyncpa [#allocation6], 1

</llo_original>
